<compile_context>
chip_gen: v7x
topology: tpu7x:2x2x1
jax: 0.10.0
libtpu: 0.0.40
codegen_flags: <defaults>
</compile_context>

<pallas_src>
import math

import jax
import jax.numpy as jnp
from jax.experimental import pallas as pl
from jax.experimental.pallas import tpu as pltpu

_LANE = 128


def _round_up(x: int, m: int) -> int:
    return ((x + m - 1) // m) * m


def _physical_vmem_bytes() -> int:
    """Per-TensorCore VMEM capacity (generation-aware) with a safe fallback."""
    try:
        v = int(pltpu.get_tpu_info().vmem_capacity_bytes)
        if v > 0:
            return v
    except Exception:
        pass
    return 64 * 1024 * 1024  # v7x per-TC size: safe lower bound on all gens


# ---------------------------------------------------------------------------
# Kernels
# ---------------------------------------------------------------------------
def _linear_kernel(x_ref, w_ref, o_ref):
    # Single K block: one MXU matmul per (m, n) tile, f32 accumulation.
    o_ref[...] = jnp.dot(
        x_ref[...], w_ref[...], preferred_element_type=jnp.float32
    ).astype(o_ref.dtype)


def _linear_kernel_acc(x_ref, w_ref, o_ref, acc_ref):
    # K is tiled: accumulate partial products in an f32 VMEM scratch.
    k = pl.program_id(2)

    @pl.when(k == 0)
    def _():
        acc_ref[...] = jnp.zeros_like(acc_ref)

    acc_ref[...] += jnp.dot(
        x_ref[...], w_ref[...], preferred_element_type=jnp.float32
    )

    @pl.when(k == pl.num_programs(2) - 1)
    def _():
        o_ref[...] = acc_ref[...].astype(o_ref.dtype)


# ---------------------------------------------------------------------------
# Tiling selection
# ---------------------------------------------------------------------------
def _choose_tiles(m, k, n_pad, cbytes, obytes, budget, block_m, weight_buffers):
    """Return (tm, tk, tn, resident_weight)."""
    if m <= 256:
        # Single full-extent row block (full-dim exemption from 8-divisibility).
        tm_max = m
        tm_min = m
    else:
        tm_max = min(_round_up(block_m, _LANE), _round_up(m, _LANE))
        tm_min = 256  # never waste the 256x256 MXU with tall-skinny tiles

    # --- Preferred layout: whole (K, Npad) weight resident in VMEM. ---------
    def resident_bytes(tm_):
        return (weight_buffers * k * n_pad * cbytes   # resident weight
                + 2 * tm_ * k * cbytes                # x tile, double-buffered
                + 2 * tm_ * n_pad * obytes)           # out tile, double-buffered

    tm = tm_max
    while tm > tm_min and resident_bytes(tm) > budget:
        tm = max(tm_min, _round_up(tm // 2, _LANE))
    if resident_bytes(tm) <= budget:
        return tm, k, n_pad, True

    # --- Fallback: tile N (and K if needed); weight tiles double-buffered. --
    tn = _LANE
    for cand in range(min(n_pad, 512), _LANE - 1, -_LANE):
        if n_pad % cand == 0:
            tn = cand
            break

    def tiled_bytes(tm_, tk_):
        return (2 * tk_ * tn * cbytes      # weight tile, double-buffered
                + 2 * tm_ * tk_ * cbytes   # x tile, double-buffered
                + 2 * tm_ * tn * obytes    # out tile, double-buffered
                + tm_ * tn * 4)            # f32 accumulator scratch

    tm = tm_max
    tk = k
    while tm > tm_min and tiled_bytes(tm, tk) > budget:
        tm = max(tm_min, _round_up(tm // 2, _LANE))
    if tiled_bytes(tm, tk) > budget:
        tk = 512 if k > 512 else _round_up(k, _LANE)
        while tk > _LANE and tiled_bytes(tm, tk) > budget:
            tk = max(_LANE, tk // 2)
    return tm, tk, tn, False


# ---------------------------------------------------------------------------
# pallas_call wrapper
# ---------------------------------------------------------------------------
def _matmul_pallas(x2d, w, m, k, n_pad, out_dtype, budget, limit, block_m,
                   weight_buffers):
    cbytes = x2d.dtype.itemsize
    obytes = jnp.dtype(out_dtype).itemsize

    tm, tk, tn, resident = _choose_tiles(
        m, k, n_pad, cbytes, obytes, budget, block_m, weight_buffers)

    # K-tiling fallback needs exact division: zero-pad K on both operands so a
    # partial K block can never pollute the accumulation (zeros contribute 0).
    if tk < k and k % tk != 0:
        k_new = _round_up(k, tk)
        x2d = jnp.pad(x2d, ((0, 0), (0, k_new - k)))
        w = jnp.pad(w, ((0, k_new - k), (0, 0)))
        k = k_new

    m_tiles = pl.cdiv(m, tm)
    n_tiles = n_pad // tn
    k_tiles = pl.cdiv(k, tk)

    w_spec_kwargs = {}
    if resident and weight_buffers == 1:
        # Constant index_map => weight is DMA'd once; single buffer suffices.
        w_spec_kwargs = dict(pipeline_mode=pl.Buffered(1))

    in_specs = [
        pl.BlockSpec((tm, tk), lambda i, j, kk: (i, kk)),
        pl.BlockSpec((tk, tn), lambda i, j, kk: (kk, j), **w_spec_kwargs),
    ]
    out_spec = pl.BlockSpec((tm, tn), lambda i, j, kk: (i, j))

    if k_tiles > 1:
        kernel = _linear_kernel_acc
        scratch = (pltpu.VMEM((tm, tn), jnp.float32),)
    else:
        kernel = _linear_kernel
        scratch = ()

    cost = pl.CostEstimate(
        flops=2 * m * k * n_pad,
        transcendentals=0,
        bytes_accessed=(m * k * cbytes
                        + k * n_pad * cbytes
                        + m * n_pad * obytes),
    )

    out = pl.pallas_call(
        kernel,
        out_shape=jax.ShapeDtypeStruct((m, n_pad), out_dtype),
        grid=(m_tiles, n_tiles, k_tiles),
        in_specs=in_specs,
        out_specs=out_spec,
        scratch_shapes=scratch,
        compiler_params=pltpu.CompilerParams(
            dimension_semantics=("parallel", "parallel", "arbitrary"),
            vmem_limit_bytes=int(limit),
        ),
        cost_estimate=cost,
    )(x2d, w)
    return jax.block_until_ready(out)


# ---------------------------------------------------------------------------
# Public API
# ---------------------------------------------------------------------------
def prepare_style_input_weight(weight_t, compute_dtype=None):
    """One-time parameter prep (hoist out of the forward hot path).

    weight_t : (input_dim, output_dim) — the torch (out, in) weight transposed.
    Returns (w_prepared, output_dim) where w_prepared is cast to compute_dtype
    (if given) and zero-padded along N to a multiple of 128 (lane-dense stores).
    """
    out_dim = weight_t.shape[-1]
    if compute_dtype is not None:
        weight_t = weight_t.astype(compute_dtype)
    n_pad = _round_up(out_dim, _LANE)
    if n_pad != out_dim:
        weight_t = jnp.pad(weight_t, ((0, 0), (0, n_pad - out_dim)))
    return weight_t, out_dim


def style_input_forward(x, weight_prepared, out_dim=None, *, block_m=512):
    """Pallas equivalent of StyleInput.forward: y = x @ W^T (bias-free).

    x               : (..., input_dim), ideally already in the compute dtype.
    weight_prepared : (input_dim, Npad) from prepare_style_input_weight
                      (a raw (input_dim, output_dim) weight is also accepted).
    out_dim         : true output_dim (defaults to weight's last dim).
    Returns (..., out_dim) in x.dtype.
    """
    lead_shape = x.shape[:-1]
    k = x.shape[-1]
    m = int(math.prod(lead_shape)) if lead_shape else 1

    if out_dim is None:
        out_dim = weight_prepared.shape[-1]
    out_dtype = x.dtype
    compute_dtype = weight_prepared.dtype

    # Accept an unprepared weight too (pad here), but callers should hoist this.
    w = weight_prepared
    n_pad = _round_up(w.shape[-1], _LANE)
    if n_pad != w.shape[-1]:
        w = jnp.pad(w, ((0, 0), (0, n_pad - w.shape[-1])))

    x2d = x.reshape(m, k)
    if x2d.dtype != compute_dtype:
        # Callers should feed x already in the compute dtype to avoid this
        # extra HBM pass (see perf notes).
        x2d = x2d.astype(compute_dtype)

    vmem = _physical_vmem_bytes()
    budget = (vmem * 3) // 4   # ~48 MiB on v7x, ~96 MiB on v5e/v6e
    limit = (vmem * 7) // 8    # ~56 MiB on v7x, ~112 MiB on v5e/v6e

    try:
        out = _matmul_pallas(x2d, w, m, k, n_pad, out_dtype, budget, limit,
                             block_m, weight_buffers=1)
    except Exception:
        # Conservative retry: no pl.Buffered(1), double-buffered weight
        # accounting (may pick smaller tiles or the tiled-weight path).
        out = _matmul_pallas(x2d, w, m, k, n_pad, out_dtype, budget, limit,
                             block_m, weight_buffers=2)

    if out_dim != n_pad:
        out = out[:, :out_dim]
    return out.reshape(*lead_shape, out_dim)


def make_style_input_params(key, input_dim: int, output_dim: int):
    """Xavier-uniform init matching nn.init.xavier_uniform_ on a
    (output_dim, input_dim) Linear weight; returned already transposed."""
    bound = math.sqrt(6.0 / (input_dim + output_dim))
    w = jax.random.uniform(
        key, (output_dim, input_dim), minval=-bound, maxval=bound,
        dtype=jnp.float32,
    )
    return w.T  # (input_dim, output_dim)


if __name__ == "__main__":
    key = jax.random.PRNGKey(0)
    k_x, k_w = jax.random.split(key)

    batch, seq, input_dim, output_dim = 2, 8, 32, 64

    x = jax.random.normal(k_x, (batch, seq, input_dim), dtype=jnp.float32)
    weight_t = make_style_input_params(k_w, input_dim, output_dim)

    y_ref = x @ weight_t

    # f32 compute path: exact match vs reference (weight prepared once).
    w_f32, od = prepare_style_input_weight(weight_t)
    y = jax.block_until_ready(style_input_forward(x, w_f32, od))
    assert y.shape == (batch, seq, output_dim)
    assert jnp.allclose(y, y_ref, atol=1e-5, rtol=1e-5)

    # bf16 compute path: weight prepared once in bf16, activation already bf16
    # (so the "half HBM traffic" claim is real), f32 MXU accumulation.
    w_bf16, od_bf = prepare_style_input_weight(weight_t,
                                               compute_dtype=jnp.bfloat16)
    x_bf16 = x.astype(jnp.bfloat16)
    y_bf16 = jax.block_until_ready(style_input_forward(x_bf16, w_bf16, od_bf))
    assert y_bf16.shape == (batch, seq, output_dim)
    assert jnp.allclose(y_bf16.astype(jnp.float32), y_ref, atol=5e-2, rtol=5e-2)

    print("KERNEL_OK")
</pallas_src>

<mosaic_0001>
module attributes {stable_mosaic.version = 11 : i64} {
  func.func @_linear_kernel(%arg0: i32, %arg1: i32, %arg2: i32, %arg3: memref<16x32xf32, #tpu.memory_space<vmem>>, %arg4: memref<32x128xf32, #tpu.memory_space<vmem>>, %arg5: memref<16x128xf32, #tpu.memory_space<vmem>>) attributes {dimension_semantics = [#tpu.dimension_semantics<parallel>, #tpu.dimension_semantics<parallel>, #tpu.dimension_semantics<arbitrary>], iteration_bounds = array<i64: 1, 1, 1>, scalar_prefetch = 0 : i64, scratch_operands = 0 : i64, tpu.core_type = #tpu.core_type<tc>, window_params = [{transform_indices = @transform_0, window_bounds = array<i64: 16, 32>}, {pipeline_mode = #tpu.pipeline_mode<synchronous>, transform_indices = @transform_1, window_bounds = array<i64: 32, 128>}, {transform_indices = @transform_2, window_bounds = array<i64: 16, 128>}]} {
    %c0 = arith.constant 0 : index
    %c0_0 = arith.constant 0 : index
    %0 = vector.load %arg3[%c0, %c0_0] : memref<16x32xf32, #tpu.memory_space<vmem>>, vector<16x32xf32>
    %c0_1 = arith.constant 0 : index
    %c0_2 = arith.constant 0 : index
    %1 = vector.load %arg4[%c0_1, %c0_2] : memref<32x128xf32, #tpu.memory_space<vmem>>, vector<32x128xf32>
    %cst = arith.constant dense<0.000000e+00> : vector<16x128xf32>
    %2 = tpu.matmul %0, %1, %cst {dimension_numbers = #tpu.dot_dimension_numbers<[1], [0], [0], [1], [0, 0, 1, 1], [], []>} : vector<16x32xf32>, vector<32x128xf32>, vector<16x128xf32> -> vector<16x128xf32>
    %c0_3 = arith.constant 0 : index
    %c0_4 = arith.constant 0 : index
    %3 = vector.load %arg5[%c0_3, %c0_4] : memref<16x128xf32, #tpu.memory_space<vmem>>, vector<16x128xf32>
    tpu.vector_store %arg5[%c0_3, %c0_4], %2 {strides = array<i32>} : memref<16x128xf32, #tpu.memory_space<vmem>>, vector<16x128xf32>,
    return
  }
  func.func @transform_0(%arg0: i32, %arg1: i32, %arg2: i32) -> (i32, i32) {
    %c0_i32 = arith.constant 0 : i32
    return %arg0, %arg2 : i32, i32
  }
  func.func @transform_1(%arg0: i32, %arg1: i32, %arg2: i32) -> (i32, i32) {
    %c0_i32 = arith.constant 0 : i32
    return %arg2, %arg1 : i32, i32
  }
  func.func @transform_2(%arg0: i32, %arg1: i32, %arg2: i32) -> (i32, i32) {
    %c0_i32 = arith.constant 0 : i32
    return %arg0, %arg1 : i32, i32
  }
}

module attributes {stable_mosaic.version = 11 : i64} {
  func.func @_linear_kernel(%arg0: i32, %arg1: i32, %arg2: i32, %arg3: memref<16x32xf32, #tpu.memory_space<vmem>>, %arg4: memref<32x128xf32, #tpu.memory_space<vmem>>, %arg5: memref<16x128xf32, #tpu.memory_space<vmem>>) attributes {dimension_semantics = [#tpu.dimension_semantics<parallel>, #tpu.dimension_semantics<parallel>, #tpu.dimension_semantics<arbitrary>], iteration_bounds = array<i64: 1, 1, 1>, scalar_prefetch = 0 : i64, scratch_operands = 0 : i64, tpu.core_type = #tpu.core_type<tc>, window_params = [{transform_indices = @transform_0, window_bounds = array<i64: 16, 32>}, {transform_indices = @transform_1, window_bounds = array<i64: 32, 128>}, {transform_indices = @transform_2, window_bounds = array<i64: 16, 128>}]} {
    %c0 = arith.constant 0 : index
    %c0_0 = arith.constant 0 : index
    %0 = vector.load %arg3[%c0, %c0_0] : memref<16x32xf32, #tpu.memory_space<vmem>>, vector<16x32xf32>
    %c0_1 = arith.constant 0 : index
    %c0_2 = arith.constant 0 : index
    %1 = vector.load %arg4[%c0_1, %c0_2] : memref<32x128xf32, #tpu.memory_space<vmem>>, vector<32x128xf32>
    %cst = arith.constant dense<0.000000e+00> : vector<16x128xf32>
    %2 = tpu.matmul %0, %1, %cst {dimension_numbers = #tpu.dot_dimension_numbers<[1], [0], [0], [1], [0, 0, 1, 1], [], []>} : vector<16x32xf32>, vector<32x128xf32>, vector<16x128xf32> -> vector<16x128xf32>
    %c0_3 = arith.constant 0 : index
    %c0_4 = arith.constant 0 : index
    %3 = vector.load %arg5[%c0_3, %c0_4] : memref<16x128xf32, #tpu.memory_space<vmem>>, vector<16x128xf32>
    tpu.vector_store %arg5[%c0_3, %c0_4], %2 {strides = array<i32>} : memref<16x128xf32, #tpu.memory_space<vmem>>, vector<16x128xf32>,
    return
  }
  func.func @transform_0(%arg0: i32, %arg1: i32, %arg2: i32) -> (i32, i32) {
    %c0_i32 = arith.constant 0 : i32
    return %arg0, %arg2 : i32, i32
  }
  func.func @transform_1(%arg0: i32, %arg1: i32, %arg2: i32) -> (i32, i32) {
    %c0_i32 = arith.constant 0 : i32
    return %arg2, %arg1 : i32, i32
  }
  func.func @transform_2(%arg0: i32, %arg1: i32, %arg2: i32) -> (i32, i32) {
    %c0_i32 = arith.constant 0 : i32
    return %arg0, %arg1 : i32, i32
  }
}

</mosaic_0001>

<llo_original>
// kernel: tpu_custom_call.1
$region0: #{tpu_custom_call.1}
  #allocation0 [shape = 'u32[]', space=smem, size = 0x4, offset = 0x4, fixed_abs, tag = 'smem constant byte address 0x4 - core index']
  #allocation1 [shape = 'u32[144,128]{1,0:T(1,128)}', space=vmem, size = 0x12000, scoped, tag = 'internal scratch']
  %s0 = inlined_call_operand.hbm [shape: f32[16,32], index: 0, kind: input, shape index: {}]
  %s1 = inlined_call_operand.hbm [shape: f32[32,128], index: 1, kind: input, shape index: {}]
  %s2 = inlined_call_operand.hbm [shape: f32[16,128], index: 2, kind: output, shape index: {}]
  %s3 = sld [smem:[#allocation0]]
  $region26: #{tpu_custom_call.1} parent=0
    _
  %s5 = ssub.s32 1, %s3
  %s6 = scalar_select 0, %s5, %s3
  $region1: #{tpu_custom_call.1} parent=0
    #allocation2 [shape = 'u8[8192]{0}', space=vmem, size = 0x2000, scoped, tag = 'input window, operand 0, single buffered']
    #allocation3 [shape = 's32[1]{0}', space=sflag, size = 0x4, scoped, tag = 'scoped memory for tpu_custom_call.1']
    #allocation4 [shape = 's32[1]{0}', space=sflag, size = 0x4, scoped, tag = 'scoped memory for tpu_custom_call.1']
    #allocation5 [shape = 'u8[16384]{0}', space=vmem, size = 0x4000, scoped, tag = 'input window, operand 1, single buffered']
    #allocation6 [shape = 's32[1]{0}', space=sflag, size = 0x4, scoped, tag = 'scoped memory for tpu_custom_call.1']
    #allocation7 [shape = 'u8[8192]{0}', space=vmem, size = 0x2000, scoped, tag = 'output window, operand 0, single buffered']
    %7 = vsyncpa [#allocation3], 0
    %8 = vsyncpa [#allocation6], 0
    %9 = vsyncpa [#allocation4], 0
    // Predicated region
    $region2: #{tpu_custom_call.1} parent=1 // pred_check
      _
    $region3: #{tpu_custom_call.1} parent=1 // pred_check_branch
      %11 = sbr.rel (0) target = $region5
    $region4: #{tpu_custom_call.1} parent=1 // pred_region
      %s13 = ssub.s32 256, 256
      %14 = vsyncadd [#allocation3], %s13
      %s15 = sshll.u32 [#allocation2], 4
      %s16 = int_to_ptr.vmem [resolvable:$true] %s15
      %21 = dma.hbm_to_vmem [thread:$0]  %s0, 256, %s16, [#allocation3], 128, 128, 8
    $region5: #{tpu_custom_call.1} parent=1 // pred_fallthru
      _
    // Predicated region
    $region6: #{tpu_custom_call.1} parent=1 // pred_check
      _
    $region7: #{tpu_custom_call.1} parent=1 // pred_check_branch
      %23 = sbr.rel (0) target = $region9
    $region8: #{tpu_custom_call.1} parent=1 // pred_region
      %s25 = ssub.s32 512, 512
      %26 = vsyncadd [#allocation6], %s25
      %s27 = sshll.u32 [#allocation5], 4
      %s28 = int_to_ptr.vmem [resolvable:$true] %s27
      %33 = dma.hbm_to_vmem [thread:$0]  %s1, 512, %s28, [#allocation6], 128, 128, 8
    $region9: #{tpu_custom_call.1} parent=1 // pred_fallthru
      _
    // Predicated region
    $region10: #{tpu_custom_call.1} parent=1 // pred_check
      _
    $region11: #{tpu_custom_call.1} parent=1 // pred_check_branch
      %35 = sbr.rel (0) target = $region13
    $region12: #{tpu_custom_call.1} parent=1 // pred_region
      %36 = dma.done [#allocation3], 256
    $region13: #{tpu_custom_call.1} parent=1 // pred_fallthru
      _
    // Predicated region
    $region14: #{tpu_custom_call.1} parent=1 // pred_check
      _
    $region15: #{tpu_custom_call.1} parent=1 // pred_check_branch
      %38 = sbr.rel (0) target = $region17
    $region16: #{tpu_custom_call.1} parent=1 // pred_region
      %39 = dma.done [#allocation6], 512
    $region17: #{tpu_custom_call.1} parent=1 // pred_fallthru
      _
    %v40 = vld [vmem:[#allocation2] sm:$0xff]
    %v41 = vld [vmem:[#allocation2 + $0x8] sm:$0xff]
    %v42 = vld [vmem:[#allocation5] sm:$0xff]
    %v43 = vld [vmem:[#allocation5 + $0x8] sm:$0xff]
    %v44 = vld [vmem:[#allocation5 + $0x10] sm:$0xff]
    %v45 = vld [vmem:[#allocation5 + $0x18] sm:$0xff]
    %vm46 = vcmask 261120
    %v48 = vsel %vm46, %v40, 0
    %v51 = vsel %vm46, %v41, 0
    %53 = vmatprep.subr.mxu0 0.0
    %54 = vmatpush1.msra.mxu0 %v42
    %55 = vmatprep.subr.mxu0 0.0
    %56 = vmatpush1.msra.mxu0 %v43
    %57 = vmatprep.subr.mxu0 0.0
    %58 = vmatpush1.msra.mxu0 %v44
    %59 = vmatprep.subr.mxu0 0.0
    %60 = vmatpush1.msra.mxu0 %v45
    %61 = vmatprep.subr.mxu0 0.0
    %62 = vmatpush1.msra.mxu0 0.0
    %63 = vmatprep.subr.mxu0 0.0
    %64 = vmatpush1.msra.mxu0 0.0
    %65 = vmatprep.subr.mxu0 0.0
    %66 = vmatpush1.msra.mxu0 0.0
    %67 = vmatprep.subr.mxu0 0.0
    %68 = vmatpush1.msra.mxu0 0.0
    %69 = vmatprep.subr.mxu0 0.0
    %70 = vmatpush1.msra.mxu0 0.0
    %71 = vmatprep.subr.mxu0 0.0
    %72 = vmatpush1.msra.mxu0 0.0
    %73 = vmatprep.subr.mxu0 0.0
    %74 = vmatpush1.msra.mxu0 0.0
    %75 = vmatprep.subr.mxu0 0.0
    %76 = vmatpush1.msra.mxu0 0.0
    %77 = vmatprep.subr.mxu0 0.0
    %78 = vmatpush1.msra.mxu0 0.0
    %79 = vmatprep.subr.mxu0 0.0
    %80 = vmatpush1.msra.mxu0 0.0
    %81 = vmatprep.subr.mxu0 0.0
    %82 = vmatpush1.msra.mxu0 0.0
    %83 = vmatprep.subr.mxu0 0.0
    %84 = vmatpush1.msra.mxu0 0.0
    %85 = vmatprep.subr.mxu0 0.0
    %86 = vmatpush1.msra.mxu0 0.0
    %87 = vmatprep.subr.mxu0 0.0
    %88 = vmatpush1.msra.mxu0 0.0
    %89 = vmatprep.subr.mxu0 0.0
    %90 = vmatpush1.msra.mxu0 0.0
    %91 = vmatprep.subr.mxu0 0.0
    %92 = vmatpush1.msra.mxu0 0.0
    %93 = vmatprep.subr.mxu0 0.0
    %94 = vmatpush1.msra.mxu0 0.0
    %95 = vmatprep.subr.mxu0 0.0
    %96 = vmatpush1.msra.mxu0 0.0
    %97 = vmatprep.subr.mxu0 0.0
    %98 = vmatpush1.msra.mxu0 0.0
    %99 = vmatprep.subr.mxu0 0.0
    %100 = vmatpush1.msra.mxu0 0.0
    %101 = vmatprep.subr.mxu0 0.0
    %102 = vmatpush1.msra.mxu0 0.0
    %103 = vmatprep.subr.mxu0 0.0
    %104 = vmatpush1.msra.mxu0 0.0
    %105 = vmatprep.subr.mxu0 0.0
    %106 = vmatpush1.msra.mxu0 0.0
    %107 = vmatprep.subr.mxu0 0.0
    %108 = vmatpush1.msra.mxu0 0.0
    %109 = vmatprep.subr.mxu0 0.0
    %110 = vmatpush1.msra.mxu0 0.0
    %111 = vmatprep.subr.mxu0 0.0
    %112 = vmatpush1.msra.mxu0 0.0
    %113 = vmatprep.subr.mxu0 0.0
    %114 = vmatpush1.msra.mxu0 0.0
    %115 = vmatprep.subr.mxu0 0.0
    %116 = vmatpush1.msra.mxu0 0.0
    %117 = vmatprep.mubr.f32.mxu0 0.0
    %118 = vmatmul.mubr.f32.gmra.mrb[0].mxu0 %v48
    %v119 = vpop.f32.mrb[0].mxu0
    %v120 = vadd.f32 0.0, %v119
    %v121 = vpop.f32.mrb[0].mxu0
    %122 = vmatprep.mubr.f32.mxu0 0.0
    %123 = vmatmul.mubr.f32.gmra.mrb[0].mxu0 %v51
    %v124 = vpop.f32.mrb[0].mxu0
    %v125 = vadd.f32 0.0, %v124
    %v126 = vpop.f32.mrb[0].mxu0
    %127 = vdwg.mxu0
    %128 = vst [vmem:[#allocation7] sm:$0xff] %v120
    %129 = vst [vmem:[#allocation7 + $0x8] sm:$0xff] %v125
    // Predicated region
    $region18: #{tpu_custom_call.1} parent=1 // pred_check
      _
    $region19: #{tpu_custom_call.1} parent=1 // pred_check_branch
      %131 = sbr.rel (0) target = $region21
    $region20: #{tpu_custom_call.1} parent=1 // pred_region
      %s133 = ssub.s32 256, 256
      %134 = vsyncadd [#allocation4], %s133
      %s135 = sshll.u32 [#allocation7], 4
      %s136 = int_to_ptr.vmem [resolvable:$true] %s135
      %141 = dma.vmem_to_hbm [thread:$0]  %s136, 256, %s2, [#allocation4], 128, 128, 8
    $region21: #{tpu_custom_call.1} parent=1 // pred_fallthru
      _
    // Predicated region
    $region22: #{tpu_custom_call.1} parent=1 // pred_check
      _
    $region23: #{tpu_custom_call.1} parent=1 // pred_check_branch
      %143 = sbr.rel (0) target = $region25
    $region24: #{tpu_custom_call.1} parent=1 // pred_region
      %144 = dma.done [#allocation4], 256
    $region25: #{tpu_custom_call.1} parent=1 // pred_fallthru
      _
    %145 = vsyncpa [#allocation3], 1
    %146 = vsyncpa [#allocation6], 1
    %147 = vsyncpa [#allocation4], 1

// kernel: tpu_custom_call.1
$region0: #{tpu_custom_call.1}
  #allocation0 [shape = 'u32[]', space=smem, size = 0x4, offset = 0x4, fixed_abs, tag = 'smem constant byte address 0x4 - core index']
  #allocation1 [shape = 'u32[144,128]{1,0:T(1,128)}', space=vmem, size = 0x12000, scoped, tag = 'internal scratch']
  %s0 = inlined_call_operand.hbm [shape: f32[16,32], index: 0, kind: input, shape index: {}]
  %s1 = inlined_call_operand.hbm [shape: f32[32,128], index: 1, kind: input, shape index: {}]
  %s2 = inlined_call_operand.hbm [shape: f32[16,128], index: 2, kind: output, shape index: {}]
  %s3 = sld [smem:[#allocation0]]
  $region26: #{tpu_custom_call.1} parent=0
    _
  %s5 = ssub.s32 1, %s3
  %s6 = scalar_select 0, %s5, %s3
  $region1: #{tpu_custom_call.1} parent=0
    #allocation2 [shape = 'u8[8192]{0}', space=vmem, size = 0x2000, scoped, tag = 'input window, operand 0, single buffered']
    #allocation3 [shape = 's32[1]{0}', space=sflag, size = 0x4, scoped, tag = 'scoped memory for tpu_custom_call.1']
    #allocation4 [shape = 's32[1]{0}', space=sflag, size = 0x4, scoped, tag = 'scoped memory for tpu_custom_call.1']
    #allocation5 [shape = 'u8[16384]{0}', space=vmem, size = 0x4000, scoped, tag = 'input window, operand 1, single buffered']
    #allocation6 [shape = 's32[1]{0}', space=sflag, size = 0x4, scoped, tag = 'scoped memory for tpu_custom_call.1']
    #allocation7 [shape = 'u8[8192]{0}', space=vmem, size = 0x2000, scoped, tag = 'output window, operand 0, single buffered']
    %7 = vsyncpa [#allocation3], 0
    %8 = vsyncpa [#allocation6], 0
    %9 = vsyncpa [#allocation4], 0
    // Predicated region
    $region2: #{tpu_custom_call.1} parent=1 // pred_check
      _
    $region3: #{tpu_custom_call.1} parent=1 // pred_check_branch
      %11 = sbr.rel (0) target = $region5
    $region4: #{tpu_custom_call.1} parent=1 // pred_region
      %s13 = ssub.s32 256, 256
      %14 = vsyncadd [#allocation3], %s13
      %s15 = sshll.u32 [#allocation2], 4
      %s16 = int_to_ptr.vmem [resolvable:$true] %s15
      %21 = dma.hbm_to_vmem [thread:$0]  %s0, 256, %s16, [#allocation3], 128, 128, 8
    $region5: #{tpu_custom_call.1} parent=1 // pred_fallthru
      _
    // Predicated region
    $region6: #{tpu_custom_call.1} parent=1 // pred_check
      _
    $region7: #{tpu_custom_call.1} parent=1 // pred_check_branch
      %23 = sbr.rel (0) target = $region9
    $region8: #{tpu_custom_call.1} parent=1 // pred_region
      %s25 = ssub.s32 512, 512
      %26 = vsyncadd [#allocation6], %s25
      %s27 = sshll.u32 [#allocation5], 4
      %s28 = int_to_ptr.vmem [resolvable:$true] %s27
      %33 = dma.hbm_to_vmem [thread:$0]  %s1, 512, %s28, [#allocation6], 128, 128, 8
    $region9: #{tpu_custom_call.1} parent=1 // pred_fallthru
      _
    // Predicated region
    $region10: #{tpu_custom_call.1} parent=1 // pred_check
      _
    $region11: #{tpu_custom_call.1} parent=1 // pred_check_branch
      %35 = sbr.rel (0) target = $region13
    $region12: #{tpu_custom_call.1} parent=1 // pred_region
      %36 = dma.done [#allocation3], 256
    $region13: #{tpu_custom_call.1} parent=1 // pred_fallthru
      _
    // Predicated region
    $region14: #{tpu_custom_call.1} parent=1 // pred_check
      _
    $region15: #{tpu_custom_call.1} parent=1 // pred_check_branch
      %38 = sbr.rel (0) target = $region17
    $region16: #{tpu_custom_call.1} parent=1 // pred_region
      %39 = dma.done [#allocation6], 512
    $region17: #{tpu_custom_call.1} parent=1 // pred_fallthru
      _
    %v40 = vld [vmem:[#allocation2] sm:$0xff]
    %v41 = vld [vmem:[#allocation2 + $0x8] sm:$0xff]
    %v42 = vld [vmem:[#allocation5] sm:$0xff]
    %v43 = vld [vmem:[#allocation5 + $0x8] sm:$0xff]
    %v44 = vld [vmem:[#allocation5 + $0x10] sm:$0xff]
    %v45 = vld [vmem:[#allocation5 + $0x18] sm:$0xff]
    %vm46 = vcmask 261120
    %v48 = vsel %vm46, %v40, 0
    %v51 = vsel %vm46, %v41, 0
    %53 = vmatprep.subr.mxu0 0.0
    %54 = vmatpush1.msra.mxu0 %v42
    %55 = vmatprep.subr.mxu0 0.0
    %56 = vmatpush1.msra.mxu0 %v43
    %57 = vmatprep.subr.mxu0 0.0
    %58 = vmatpush1.msra.mxu0 %v44
    %59 = vmatprep.subr.mxu0 0.0
    %60 = vmatpush1.msra.mxu0 %v45
    %61 = vmatprep.subr.mxu0 0.0
    %62 = vmatpush1.msra.mxu0 0.0
    %63 = vmatprep.subr.mxu0 0.0
    %64 = vmatpush1.msra.mxu0 0.0
    %65 = vmatprep.subr.mxu0 0.0
    %66 = vmatpush1.msra.mxu0 0.0
    %67 = vmatprep.subr.mxu0 0.0
    %68 = vmatpush1.msra.mxu0 0.0
    %69 = vmatprep.subr.mxu0 0.0
    %70 = vmatpush1.msra.mxu0 0.0
    %71 = vmatprep.subr.mxu0 0.0
    %72 = vmatpush1.msra.mxu0 0.0
    %73 = vmatprep.subr.mxu0 0.0
    %74 = vmatpush1.msra.mxu0 0.0
    %75 = vmatprep.subr.mxu0 0.0
    %76 = vmatpush1.msra.mxu0 0.0
    %77 = vmatprep.subr.mxu0 0.0
    %78 = vmatpush1.msra.mxu0 0.0
    %79 = vmatprep.subr.mxu0 0.0
    %80 = vmatpush1.msra.mxu0 0.0
    %81 = vmatprep.subr.mxu0 0.0
    %82 = vmatpush1.msra.mxu0 0.0
    %83 = vmatprep.subr.mxu0 0.0
    %84 = vmatpush1.msra.mxu0 0.0
    %85 = vmatprep.subr.mxu0 0.0
    %86 = vmatpush1.msra.mxu0 0.0
    %87 = vmatprep.subr.mxu0 0.0
    %88 = vmatpush1.msra.mxu0 0.0
    %89 = vmatprep.subr.mxu0 0.0
    %90 = vmatpush1.msra.mxu0 0.0
    %91 = vmatprep.subr.mxu0 0.0
    %92 = vmatpush1.msra.mxu0 0.0
    %93 = vmatprep.subr.mxu0 0.0
    %94 = vmatpush1.msra.mxu0 0.0
    %95 = vmatprep.subr.mxu0 0.0
    %96 = vmatpush1.msra.mxu0 0.0
    %97 = vmatprep.subr.mxu0 0.0
    %98 = vmatpush1.msra.mxu0 0.0
    %99 = vmatprep.subr.mxu0 0.0
    %100 = vmatpush1.msra.mxu0 0.0
    %101 = vmatprep.subr.mxu0 0.0
    %102 = vmatpush1.msra.mxu0 0.0
    %103 = vmatprep.subr.mxu0 0.0
    %104 = vmatpush1.msra.mxu0 0.0
    %105 = vmatprep.subr.mxu0 0.0
    %106 = vmatpush1.msra.mxu0 0.0
    %107 = vmatprep.subr.mxu0 0.0
    %108 = vmatpush1.msra.mxu0 0.0
    %109 = vmatprep.subr.mxu0 0.0
    %110 = vmatpush1.msra.mxu0 0.0
    %111 = vmatprep.subr.mxu0 0.0
    %112 = vmatpush1.msra.mxu0 0.0
    %113 = vmatprep.subr.mxu0 0.0
    %114 = vmatpush1.msra.mxu0 0.0
    %115 = vmatprep.subr.mxu0 0.0
    %116 = vmatpush1.msra.mxu0 0.0
    %117 = vmatprep.mubr.f32.mxu0 0.0
    %118 = vmatmul.mubr.f32.gmra.mrb[0].mxu0 %v48
    %v119 = vpop.f32.mrb[0].mxu0
    %v120 = vadd.f32 0.0, %v119
    %v121 = vpop.f32.mrb[0].mxu0
    %122 = vmatprep.mubr.f32.mxu0 0.0
    %123 = vmatmul.mubr.f32.gmra.mrb[0].mxu0 %v51
    %v124 = vpop.f32.mrb[0].mxu0
    %v125 = vadd.f32 0.0, %v124
    %v126 = vpop.f32.mrb[0].mxu0
    %127 = vdwg.mxu0
    %128 = vst [vmem:[#allocation7] sm:$0xff] %v120
    %129 = vst [vmem:[#allocation7 + $0x8] sm:$0xff] %v125
    // Predicated region
    $region18: #{tpu_custom_call.1} parent=1 // pred_check
      _
    $region19: #{tpu_custom_call.1} parent=1 // pred_check_branch
      %131 = sbr.rel (0) target = $region21
    $region20: #{tpu_custom_call.1} parent=1 // pred_region
      %s133 = ssub.s32 256, 256
      %134 = vsyncadd [#allocation4], %s133
      %s135 = sshll.u32 [#allocation7], 4
      %s136 = int_to_ptr.vmem [resolvable:$true] %s135
      %141 = dma.vmem_to_hbm [thread:$0]  %s136, 256, %s2, [#allocation4], 128, 128, 8
    $region21: #{tpu_custom_call.1} parent=1 // pred_fallthru
      _
    // Predicated region
    $region22: #{tpu_custom_call.1} parent=1 // pred_check
      _
    $region23: #{tpu_custom_call.1} parent=1 // pred_check_branch
      %143 = sbr.rel (0) target = $region25
    $region24: #{tpu_custom_call.1} parent=1 // pred_region
      %144 = dma.done [#allocation4], 256
    $region25: #{tpu_custom_call.1} parent=1 // pred_fallthru
      _
    %145 = vsyncpa [#allocation3], 1
    %146 = vsyncpa [#allocation6], 1
    %147 = vsyncpa [#allocation4], 1

</llo_original>
